<compile_context>
chip_gen: v7x
topology: tpu7x:2x2x1
jax: 0.10.0
libtpu: 0.0.40
codegen_flags: <defaults>
</compile_context>

<pallas_src>
import functools

import jax
import jax.numpy as jnp
from jax import lax
from jax.experimental import pallas as pl
from jax.experimental.pallas import tpu as pltpu

LANE = 128                     # lane width
SUB = 8                        # sublane rows per f32 vreg
STRIP = 128                    # rows folded per accumulator update
IN_VMEM_BUDGET = 16 << 20      # bytes for the double-buffered input blocks
VMEM_LIMIT = 32 << 20          # scoped VMEM limit (safe on v5e/v6e/v7x)


def _round_up(x, m):
    return ((x + m - 1) // m) * m


def _l1l2_kernel(p_ref, t_ref, oabs_ref, osq_ref, acc_abs, acc_sq, *,
                 tm, blocks_per_slice, n_rows, any_mask):
    pi = pl.program_id(0)      # parallel slice
    ki = pl.program_id(1)      # reduction step within the slice

    @pl.when(ki == 0)
    def _():
        acc_abs[...] = jnp.zeros_like(acc_abs)
        acc_sq[...] = jnp.zeros_like(acc_sq)

    # Unclamped global row offset of this block (used for tail masking).
    block_row0 = (pi * blocks_per_slice + ki) * tm

    n_full = tm // STRIP
    tail = tm % STRIP

    def strip(row_off, nrows, masked):
        dp = p_ref[pl.ds(row_off, nrows), :].astype(jnp.float32)
        dt = t_ref[pl.ds(row_off, nrows), :].astype(jnp.float32)
        d = dp - dt
        if masked:
            gr = (block_row0 + row_off
                  + lax.broadcasted_iota(jnp.int32, (nrows, LANE), 0))
            # True select (not multiply): garbage overhang rows -> exactly 0.
            d = jnp.where(gr < n_rows, d, 0.0)
        if nrows == acc_abs.shape[0]:
            acc_abs[...] += jnp.abs(d)
            acc_sq[...] += d * d
        else:
            acc_abs[pl.ds(0, nrows), :] += jnp.abs(d)
            acc_sq[pl.ds(0, nrows), :] += d * d

    def accumulate(masked):
        if n_full > 0:
            def body(s, carry):
                strip(pl.multiple_of(s * STRIP, STRIP), STRIP, masked)
                return carry
            lax.fori_loop(0, n_full, body, 0, unroll=min(4, n_full))
        if tail:
            strip(n_full * STRIP, tail, masked)

    if any_mask:
        # Only the block(s) that overhang the valid rows pay for the mask.
        needs_mask = (block_row0 + tm) > n_rows

        @pl.when(needs_mask)
        def _():
            accumulate(True)

        @pl.when(jnp.logical_not(needs_mask))
        def _():
            accumulate(False)
    else:
        accumulate(False)

    @pl.when(ki == blocks_per_slice - 1)
    def _():
        # Fold (STRIP,128) -> (8,128) with VPU adds; wrapper does the final sum.
        oabs_ref[...] = jnp.sum(
            acc_abs[...].reshape(STRIP // SUB, SUB, LANE), axis=0)[None]
        osq_ref[...] = jnp.sum(
            acc_sq[...].reshape(STRIP // SUB, SUB, LANE), axis=0)[None]


def l1_and_l2_loss(pred, true, l1_ratio=0.5, l2_ratio=0.5, max_block_rows=None):
    assert pred.shape == true.shape
    pred = jnp.asarray(pred)
    true = jnp.asarray(true)
    n_elem = pred.size
    assert n_elem > 0

    p = pred.reshape(-1)
    t = true.reshape(-1)

    min_item = min(p.dtype.itemsize, t.dtype.itemsize)
    align = SUB * max(1, 4 // max(1, min_item))   # 8 (f32) / 16 (bf16) rows
    chunk = LANE * align

    # Zero-copy path: n_elem % 128 == 0 -> reshape is free. Pad only for
    # lane-ragged or tiny inputs (padded zeros contribute 0 to both sums).
    # TODO(synk): bulk/remainder split would avoid this copy for large ragged inputs.
    if (n_elem % LANE != 0) or (n_elem < 2 * chunk):
        pad = (-n_elem) % chunk
        if pad:
            p = jnp.pad(p, (0, pad))
            t = jnp.pad(t, (0, pad))

    rows = p.shape[0] // LANE
    p2 = p.reshape(rows, LANE)
    t2 = t.reshape(rows, LANE)

    # Largest row-block keeping 2 inputs x 2 pipeline buffers inside budget.
    bytes_per_row = LANE * (p.dtype.itemsize + t.dtype.itemsize) * 2
    tm_cap = max(align, (IN_VMEM_BUDGET // bytes_per_row) // align * align)
    if max_block_rows is not None:
        tm_cap = max(align, min(tm_cap, (max_block_rows // align) * align))

    # Two parallel slices (both v7x TensorCores); evenly split row blocks.
    num_p = 2 if rows >= 2 * align else 1
    nb = max(num_p, pl.cdiv(rows, tm_cap))     # total row blocks
    nb = _round_up(nb, num_p)
    tm = _round_up(pl.cdiv(rows, nb), align)   # rows per block (<= tm_cap, <= rows)
    k_steps = nb // num_p
    any_mask = (nb * tm) != rows
    nbv = pl.cdiv(rows, tm)                    # last block index with valid rows

    def in_map(pi, ki):
        g = pi * k_steps + ki
        return (jnp.minimum(g, nbv - 1), 0)    # clamp phantom blocks in-bounds

    def out_map(pi, ki):
        return (pi, 0, 0)

    kernel = functools.partial(
        _l1l2_kernel, tm=tm, blocks_per_slice=k_steps, n_rows=rows,
        any_mask=any_mask)

    out_abs, out_sq = pl.pallas_call(
        kernel,
        out_shape=(jax.ShapeDtypeStruct((num_p, SUB, LANE), jnp.float32),
                   jax.ShapeDtypeStruct((num_p, SUB, LANE), jnp.float32)),
        grid_spec=pltpu.PrefetchScalarGridSpec(
            num_scalar_prefetch=0,
            grid=(num_p, k_steps),
            in_specs=[
                pl.BlockSpec((tm, LANE), in_map),
                pl.BlockSpec((tm, LANE), in_map),
            ],
            out_specs=(
                pl.BlockSpec((1, SUB, LANE), out_map),
                pl.BlockSpec((1, SUB, LANE), out_map),
            ),
            scratch_shapes=[
                pltpu.VMEM((STRIP, LANE), jnp.float32),   # running sum(|d|)
                pltpu.VMEM((STRIP, LANE), jnp.float32),   # running sum(d^2)
            ],
        ),
        compiler_params=pltpu.CompilerParams(
            dimension_semantics=("parallel", "arbitrary"),
            vmem_limit_bytes=VMEM_LIMIT),
    )(p2, t2)

    inv_n = jnp.float32(1.0 / n_elem)           # mean over TRUE element count
    sum_abs = jnp.sum(out_abs)
    sum_sq = jnp.sum(out_sq)
    return (jnp.float32(l1_ratio) * sum_abs
            + jnp.float32(l2_ratio) * sum_sq) * inv_n


if __name__ == "__main__":
    key = jax.random.PRNGKey(0)

    def ref_loss(pred, true, l1=0.5, l2=0.5):
        d = pred.astype(jnp.float32) - true.astype(jnp.float32)
        return l1 * jnp.mean(jnp.abs(d)) + l2 * jnp.mean(d * d)

    # 1) Small NCHW video-frame-like input (the module's typical usage).
    kp, kt = jax.random.split(key)
    pred = jax.random.normal(kp, (2, 4, 16, 16), dtype=jnp.float32)
    true = jax.random.normal(kt, (2, 4, 16, 16), dtype=jnp.float32)
    loss = jax.block_until_ready(l1_and_l2_loss(pred, true, 0.5, 0.5))
    ref = ref_loss(pred, true)
    assert jnp.allclose(loss, ref, rtol=1e-5, atol=1e-6), (loss, ref)

    # 2) bf16, lane-divisible but not 16-row aligned: zero-copy reshape path,
    #    2-slice parallel grid, clamped index_map, masked tail block, in-kernel
    #    bf16->f32 cast.
    kp2, kt2 = jax.random.split(kp)
    pred2 = jax.random.normal(kp2, (2, 4, 190, 200), jnp.float32).astype(jnp.bfloat16)
    true2 = jax.random.normal(kt2, (2, 4, 190, 200), jnp.float32).astype(jnp.bfloat16)
    loss2 = jax.block_until_ready(l1_and_l2_loss(pred2, true2, 0.5, 0.5))
    ref2 = ref_loss(pred2, true2)
    assert jnp.allclose(loss2, ref2, rtol=1e-4, atol=1e-5), (loss2, ref2)

    # 3) Lane-ragged tiny input + non-default ratios: exercises the pad
    #    fallback and the wrapper-applied ratios/mean.
    kp3, kt3 = jax.random.split(kp2)
    pred3 = jax.random.normal(kp3, (3, 5, 7, 11), dtype=jnp.float32)
    true3 = jax.random.normal(kt3, (3, 5, 7, 11), dtype=jnp.float32)
    loss3 = jax.block_until_ready(l1_and_l2_loss(pred3, true3, 0.3, 0.7))
    ref3 = ref_loss(pred3, true3, 0.3, 0.7)
    assert jnp.allclose(loss3, ref3, rtol=1e-5, atol=1e-6), (loss3, ref3)

    # 4) Force K>1 (multi-step reduction per slice) and the strip loop.
    kp4, kt4 = jax.random.split(kp3)
    pred4 = jax.random.normal(kp4, (2, 4, 96, 128), dtype=jnp.float32)
    true4 = jax.random.normal(kt4, (2, 4, 96, 128), dtype=jnp.float32)
    loss4 = jax.block_until_ready(
        l1_and_l2_loss(pred4, true4, 0.5, 0.5, max_block_rows=256))
    ref4 = ref_loss(pred4, true4)
    assert jnp.allclose(loss4, ref4, rtol=1e-5, atol=1e-6), (loss4, ref4)

    print("KERNEL_OK")
</pallas_src>

<mosaic_0001>
module attributes {stable_mosaic.version = 11 : i64} {
  func.func @_l1l2_kernel(%arg0: i32, %arg1: i32, %arg2: memref<8x128xf32, #tpu.memory_space<vmem>>, %arg3: memref<8x128xf32, #tpu.memory_space<vmem>>, %arg4: memref<1x8x128xf32, #tpu.memory_space<vmem>>, %arg5: memref<1x8x128xf32, #tpu.memory_space<vmem>>, %arg6: memref<128x128xf32, #tpu.memory_space<vmem>>, %arg7: memref<128x128xf32, #tpu.memory_space<vmem>>) attributes {dimension_semantics = [#tpu.dimension_semantics<parallel>, #tpu.dimension_semantics<arbitrary>], iteration_bounds = array<i64: 2, 1>, scalar_prefetch = 0 : i64, scratch_operands = 2 : i64, tpu.core_type = #tpu.core_type<tc>, window_params = [{transform_indices = @transform_0, window_bounds = array<i64: 8, 128>}, {transform_indices = @transform_1, window_bounds = array<i64: 8, 128>}, {transform_indices = @transform_2, window_bounds = array<i64: 1, 8, 128>}, {transform_indices = @transform_3, window_bounds = array<i64: 1, 8, 128>}]} {
    %c0_i32 = arith.constant 0 : i32
    %0 = arith.cmpi eq, %arg1, %c0_i32 : i32
    %1 = arith.extui %0 : i1 to i32
    %c0_i32_0 = arith.constant 0 : i32
    %2 = arith.cmpi ne, %1, %c0_i32_0 : i32
    scf.if %2 {
      %cst = arith.constant 0.000000e+00 : f32
      %17 = vector.broadcast %cst : f32 to vector<128x128xf32>
      %c0_14 = arith.constant 0 : index
      %c0_15 = arith.constant 0 : index
      %18 = vector.load %arg6[%c0_14, %c0_15] : memref<128x128xf32, #tpu.memory_space<vmem>>, vector<128x128xf32>
      tpu.vector_store %arg6[%c0_14, %c0_15], %17 {strides = array<i32>} : memref<128x128xf32, #tpu.memory_space<vmem>>, vector<128x128xf32>,
      %cst_16 = arith.constant 0.000000e+00 : f32
      %19 = vector.broadcast %cst_16 : f32 to vector<128x128xf32>
      %c0_17 = arith.constant 0 : index
      %c0_18 = arith.constant 0 : index
      %20 = vector.load %arg7[%c0_17, %c0_18] : memref<128x128xf32, #tpu.memory_space<vmem>>, vector<128x128xf32>
      tpu.vector_store %arg7[%c0_17, %c0_18], %19 {strides = array<i32>} : memref<128x128xf32, #tpu.memory_space<vmem>>, vector<128x128xf32>,
    } else {
    }
    %c0 = arith.constant 0 : index
    %c0_1 = arith.constant 0 : index
    %3 = vector.load %arg2[%c0, %c0_1] : memref<8x128xf32, #tpu.memory_space<vmem>>, vector<8x128xf32>
    %c0_2 = arith.constant 0 : index
    %c0_3 = arith.constant 0 : index
    %4 = vector.load %arg3[%c0_2, %c0_3] : memref<8x128xf32, #tpu.memory_space<vmem>>, vector<8x128xf32>
    %5 = arith.subf %3, %4 : vector<8x128xf32>
    %c0_4 = arith.constant 0 : index
    %c0_5 = arith.constant 0 : index
    %6 = vector.load %arg6[%c0_4, %c0_5] : memref<128x128xf32, #tpu.memory_space<vmem>>, vector<8x128xf32>
    %7 = math.absf %5 : vector<8x128xf32>
    %8 = arith.addf %6, %7 : vector<8x128xf32>
    %c0_6 = arith.constant 0 : index
    %c0_7 = arith.constant 0 : index
    %9 = vector.load %arg6[%c0_6, %c0_7] : memref<128x128xf32, #tpu.memory_space<vmem>>, vector<8x128xf32>
    tpu.vector_store %arg6[%c0_6, %c0_7], %8 {strides = array<i32>} : memref<128x128xf32, #tpu.memory_space<vmem>>, vector<8x128xf32>,
    %c0_8 = arith.constant 0 : index
    %c0_9 = arith.constant 0 : index
    %10 = vector.load %arg7[%c0_8, %c0_9] : memref<128x128xf32, #tpu.memory_space<vmem>>, vector<8x128xf32>
    %11 = arith.mulf %5, %5 : vector<8x128xf32>
    %12 = arith.addf %10, %11 : vector<8x128xf32>
    %c0_10 = arith.constant 0 : index
    %c0_11 = arith.constant 0 : index
    %13 = vector.load %arg7[%c0_10, %c0_11] : memref<128x128xf32, #tpu.memory_space<vmem>>, vector<8x128xf32>
    tpu.vector_store %arg7[%c0_10, %c0_11], %12 {strides = array<i32>} : memref<128x128xf32, #tpu.memory_space<vmem>>, vector<8x128xf32>,
    %c0_i32_12 = arith.constant 0 : i32
    %14 = arith.cmpi eq, %arg1, %c0_i32_12 : i32
    %15 = arith.extui %14 : i1 to i32
    %c0_i32_13 = arith.constant 0 : i32
    %16 = arith.cmpi ne, %15, %c0_i32_13 : i32
    scf.if %16 {
      %c0_14 = arith.constant 0 : index
      %c0_15 = arith.constant 0 : index
      %17 = vector.load %arg6[%c0_14, %c0_15] : memref<128x128xf32, #tpu.memory_space<vmem>>, vector<128x128xf32>
      %18 = vector.shape_cast %17 : vector<128x128xf32> to vector<16x8x128xf32>
      %cst = arith.constant dense<0.000000e+00> : vector<8x128xf32>
      %19 = vector.multi_reduction <add>, %18, %cst [0] : vector<16x8x128xf32> to vector<8x128xf32>
      %20 = vector.shape_cast %19 : vector<8x128xf32> to vector<1x8x128xf32>
      %c0_16 = arith.constant 0 : index
      %c0_17 = arith.constant 0 : index
      %c0_18 = arith.constant 0 : index
      %21 = vector.load %arg4[%c0_16, %c0_17, %c0_18] : memref<1x8x128xf32, #tpu.memory_space<vmem>>, vector<1x8x128xf32>
      tpu.vector_store %arg4[%c0_16, %c0_17, %c0_18], %20 {strides = array<i32>} : memref<1x8x128xf32, #tpu.memory_space<vmem>>, vector<1x8x128xf32>,
      %c0_19 = arith.constant 0 : index
      %c0_20 = arith.constant 0 : index
      %22 = vector.load %arg7[%c0_19, %c0_20] : memref<128x128xf32, #tpu.memory_space<vmem>>, vector<128x128xf32>
      %23 = vector.shape_cast %22 : vector<128x128xf32> to vector<16x8x128xf32>
      %cst_21 = arith.constant dense<0.000000e+00> : vector<8x128xf32>
      %24 = vector.multi_reduction <add>, %23, %cst_21 [0] : vector<16x8x128xf32> to vector<8x128xf32>
      %25 = vector.shape_cast %24 : vector<8x128xf32> to vector<1x8x128xf32>
      %c0_22 = arith.constant 0 : index
      %c0_23 = arith.constant 0 : index
      %c0_24 = arith.constant 0 : index
      %26 = vector.load %arg5[%c0_22, %c0_23, %c0_24] : memref<1x8x128xf32, #tpu.memory_space<vmem>>, vector<1x8x128xf32>
      tpu.vector_store %arg5[%c0_22, %c0_23, %c0_24], %25 {strides = array<i32>} : memref<1x8x128xf32, #tpu.memory_space<vmem>>, vector<1x8x128xf32>,
    } else {
    }
    return
  }
  func.func @transform_0(%arg0: i32, %arg1: i32) -> (i32, i32) {
    %c1_i32 = arith.constant 1 : i32
    %0 = arith.muli %arg0, %c1_i32 : i32
    %1 = arith.addi %0, %arg1 : i32
    %c1_i32_0 = arith.constant 1 : i32
    %2 = arith.minsi %1, %c1_i32_0 : i32
    %c0_i32 = arith.constant 0 : i32
    %c0_i32_1 = arith.constant 0 : i32
    return %2, %c0_i32 : i32, i32
  }
  func.func @transform_1(%arg0: i32, %arg1: i32) -> (i32, i32) {
    %c1_i32 = arith.constant 1 : i32
    %0 = arith.muli %arg0, %c1_i32 : i32
    %1 = arith.addi %0, %arg1 : i32
    %c1_i32_0 = arith.constant 1 : i32
    %2 = arith.minsi %1, %c1_i32_0 : i32
    %c0_i32 = arith.constant 0 : i32
    %c0_i32_1 = arith.constant 0 : i32
    return %2, %c0_i32 : i32, i32
  }
  func.func @transform_2(%arg0: i32, %arg1: i32) -> (i32, i32, i32) {
    %c0_i32 = arith.constant 0 : i32
    %c0_i32_0 = arith.constant 0 : i32
    %c0_i32_1 = arith.constant 0 : i32
    return %arg0, %c0_i32, %c0_i32_0 : i32, i32, i32
  }
  func.func @transform_3(%arg0: i32, %arg1: i32) -> (i32, i32, i32) {
    %c0_i32 = arith.constant 0 : i32
    %c0_i32_0 = arith.constant 0 : i32
    %c0_i32_1 = arith.constant 0 : i32
    return %arg0, %c0_i32, %c0_i32_0 : i32, i32, i32
  }
}

</mosaic_0001>

<llo_original>
// kernel: tpu_custom_call.1
$region0: #{tpu_custom_call.1}
  #allocation0 [shape = 'u32[]', space=smem, size = 0x4, offset = 0x4, fixed_abs, tag = 'smem constant byte address 0x4 - core index']
  #allocation1 [shape = 'u32[144,128]{1,0:T(1,128)}', space=vmem, size = 0x12000, scoped, tag = 'internal scratch']
  #allocation2 [shape = 'f32[128,128]{1,0:T(8,128)}', space=vmem, size = 0x10000, scoped, tag = 'scratch operand']
  #allocation3 [shape = 'f32[128,128]{1,0:T(8,128)}', space=vmem, size = 0x10000, scoped, tag = 'scratch operand']
  %s0 = inlined_call_operand.hbm [shape: f32[16,128], index: 0, kind: input, shape index: {}]
  %s1 = inlined_call_operand.hbm [shape: f32[16,128], index: 1, kind: input, shape index: {}]
  %s2 = inlined_call_operand.hbm [shape: f32[2,8,128], index: 2, kind: output, shape index: {0}]
  %s3 = inlined_call_operand.hbm [shape: f32[2,8,128], index: 3, kind: output, shape index: {1}]
  %4 = xla_tuple %s2, %s3
  %s5 = sld [smem:[#allocation0]]
  $region65: #{tpu_custom_call.1} parent=0
    _
  %s7 = ssub.s32 1, %s5
  %s8 = scalar_select 0, %s7, %s5
  $region1: #{tpu_custom_call.1} parent=0
    #allocation4 [shape = 'u8[8192]{0}', space=vmem, size = 0x2000, scoped, tag = 'input window, operand 0']
    #allocation5 [shape = 's32[2]{0}', space=sflag, size = 0x8, scoped, tag = 'scoped memory for tpu_custom_call.1']
    #allocation6 [shape = 's32[2]{0}', space=sflag, size = 0x8, scoped, tag = 'scoped memory for tpu_custom_call.1']
    #allocation7 [shape = 'u8[8192]{0}', space=vmem, size = 0x2000, scoped, tag = 'input window, operand 1']
    #allocation8 [shape = 's32[2]{0}', space=sflag, size = 0x8, scoped, tag = 'scoped memory for tpu_custom_call.1']
    #allocation9 [shape = 'u8[8192]{0}', space=vmem, size = 0x2000, scoped, tag = 'output window, operand 0']
    #allocation10 [shape = 'u8[8192]{0}', space=vmem, size = 0x2000, scoped, tag = 'output window, operand 1']
    #allocation11 [shape = 's32[2]{0}', space=sflag, size = 0x8, scoped, tag = 'scoped memory for tpu_custom_call.1']
    %9 = vsyncpa [#allocation5], 0
    %s10 = scalar_lea.sflag [#allocation5], 1
    %11 = vsyncpa %s10, 0
    %12 = vsyncpa [#allocation8], 0
    %s13 = scalar_lea.sflag [#allocation8], 1
    %14 = vsyncpa %s13, 0
    %15 = vsyncpa [#allocation6], 0
    %s16 = scalar_lea.sflag [#allocation6], 1
    %17 = vsyncpa %s16, 0
    %18 = vsyncpa [#allocation11], 0
    %s19 = scalar_lea.sflag [#allocation11], 1
    %20 = vsyncpa %s19, 0
    loop: start=0, step=1, limit=4
    $region2: #{tpu_custom_call.1} parent=1 // loop_pre_header
      _
    $region3: #{tpu_custom_call.1} parent=1 // loop_header
      %s22 = sphi 0, %s26
      %p23 = scmp.ge.s32.totalorder %s22, 4
      %s29 = sphi 0, %s41
      %s30 = sphi 0, %s37
      %s31 = sphi 0, %s29
      %s32 = sphi 0, %s30
      %s33 = sphi 0, %s31
      %s34 = sphi 0, %s32
      %s50 = sphi 0, %s52
      %s53 = sphi 0, %s50
      %s54 = sphi 0, %s53
      %s70 = sphi 0, %s54
      %s82 = sphi 0, %s84
      %s85 = sphi 0, %s82
      %s86 = sphi 0, %s85
      %s102 = sphi 0, %s86
      %s108 = sphi 0, %s110
      %s111 = sphi 0, %s108
      %s112 = sphi 0, %s111
      %s128 = sphi 0, %s112
      %s134 = sphi 0, %s136
      %s137 = sphi 0, %s134
      %s138 = sphi 0, %s137
      %s154 = sphi 0, %s138
    $region4: #{tpu_custom_call.1} parent=1 // loop_header_branch
      %25 = sbr.rel (%p23) target = $region8
    $region5: #{tpu_custom_call.1} parent=1 // loop_body
      %s27 = ssub.s32 %s22, 1
      %s28 = ssub.s32 %s22, 2
      %s35 = sadd.s32 1, %s30
      %p36 = scmp.ge.s32.totalorder %s35, 1
      %s37 = scalar_select %p36, 0, %s35
      %s38 = sadd.s32 1, %s29
      %s39 = scalar_select %p36, %s38, %s29
      %p40 = scmp.ge.s32.totalorder %s39, 2
      %s41 = scalar_select %p40, 0, %s39
      %s42 = sadd.s32 %s29, %s30
      %p43 = scmp.lt.s32.totalorder %s42, 1
      %s44 = scalar_select %p43, %s42, 1
      %s45 = sadd.s32 %s41, %s37
      %p46 = scmp.lt.s32.totalorder %s45, 1
      %s47 = scalar_select %p46, %s45, 1
      %s48 = ssub.s32 %s44, %s47
      %p49 = scmp.eq.s32.totalorder %s48, 0
      %s51 = sadd.s32 %s50, 1
      %s52 = scalar_select %p49, %s50, %s51
      %p55 = pneg %p49
      %p56 = scmp.eq.s32.totalorder %s22, 1
      %p57 = por %p55, %p56
      %p58 = scmp.ne.s32.totalorder %s50, %s53
      %p59 = scmp.eq.s32.totalorder %s22, 0
      %p60 = por %p58, %p59
      %p61 = scmp.ne.s32.totalorder %s50, %s53
      %p62 = scmp.eq.s32.totalorder %s27, 1
      %p63 = por %p61, %p62
      %p64 = scmp.ne.s32.totalorder %s53, %s54
      %p65 = scmp.eq.s32.totalorder %s27, 0
      %p66 = por %p64, %p65
      %p67 = scmp.ne.s32.totalorder %s53, %s54
      %p68 = scmp.eq.s32.totalorder %s28, 1
      %p69 = por %p67, %p68
      %p71 = scmp.ne.s32.totalorder %s54, %s70
      %p72 = scmp.eq.s32.totalorder %s28, 0
      %p73 = por %p71, %p72
      %s74 = sadd.s32 %s29, %s30
      %p75 = scmp.lt.s32.totalorder %s74, 1
      %s76 = scalar_select %p75, %s74, 1
      %s77 = sadd.s32 %s41, %s37
      %p78 = scmp.lt.s32.totalorder %s77, 1
      %s79 = scalar_select %p78, %s77, 1
      %s80 = ssub.s32 %s76, %s79
      %p81 = scmp.eq.s32.totalorder %s80, 0
      %s83 = sadd.s32 %s82, 1
      %s84 = scalar_select %p81, %s82, %s83
      %p87 = pneg %p81
      %p88 = scmp.eq.s32.totalorder %s22, 1
      %p89 = por %p87, %p88
      %p90 = scmp.ne.s32.totalorder %s82, %s85
      %p91 = scmp.eq.s32.totalorder %s22, 0
      %p92 = por %p90, %p91
      %p93 = scmp.ne.s32.totalorder %s82, %s85
      %p94 = scmp.eq.s32.totalorder %s27, 1
      %p95 = por %p93, %p94
      %p96 = scmp.ne.s32.totalorder %s85, %s86
      %p97 = scmp.eq.s32.totalorder %s27, 0
      %p98 = por %p96, %p97
      %p99 = scmp.ne.s32.totalorder %s85, %s86
      %p100 = scmp.eq.s32.totalorder %s28, 1
      %p101 = por %p99, %p100
      %p103 = scmp.ne.s32.totalorder %s86, %s102
      %p104 = scmp.eq.s32.totalorder %s28, 0
      %p105 = por %p103, %p104
      %s106 = ssub.s32 %s29, %s41
      %p107 = scmp.eq.s32.totalorder %s106, 0
      %s109 = sadd.s32 %s108, 1
      %s110 = scalar_select %p107, %s108, %s109
      %p113 = pneg %p107
      %p114 = scmp.eq.s32.totalorder %s22, 1
      %p115 = por %p113, %p114
      %p116 = scmp.ne.s32.totalorder %s108, %s111
      %p117 = scmp.eq.s32.totalorder %s22, 0
      %p118 = por %p116, %p117
      %p119 = scmp.ne.s32.totalorder %s108, %s111
      %p120 = scmp.eq.s32.totalorder %s27, 1
      %p121 = por %p119, %p120
      %p122 = scmp.ne.s32.totalorder %s111, %s112
      %p123 = scmp.eq.s32.totalorder %s27, 0
      %p124 = por %p122, %p123
      %p125 = scmp.ne.s32.totalorder %s111, %s112
      %p126 = scmp.eq.s32.totalorder %s28, 1
      %p127 = por %p125, %p126
      %p129 = scmp.ne.s32.totalorder %s112, %s128
      %p130 = scmp.eq.s32.totalorder %s28, 0
      %p131 = por %p129, %p130
      %s132 = ssub.s32 %s29, %s41
      %p133 = scmp.eq.s32.totalorder %s132, 0
      %s135 = sadd.s32 %s134, 1
      %s136 = scalar_select %p133, %s134, %s135
      %p139 = pneg %p133
      %p140 = scmp.eq.s32.totalorder %s22, 1
      %p141 = por %p139, %p140
      %p142 = scmp.ne.s32.totalorder %s134, %s137
      %p143 = scmp.eq.s32.totalorder %s22, 0
      %p144 = por %p142, %p143
      %p145 = scmp.ne.s32.totalorder %s134, %s137
      %p146 = scmp.eq.s32.totalorder %s27, 1
      %p147 = por %p145, %p146
      %p148 = scmp.ne.s32.totalorder %s137, %s138
      %p149 = scmp.eq.s32.totalorder %s27, 0
      %p150 = por %p148, %p149
      %p151 = scmp.ne.s32.totalorder %s137, %s138
      %p152 = scmp.eq.s32.totalorder %s28, 1
      %p153 = por %p151, %p152
      %p155 = scmp.ne.s32.totalorder %s138, %s154
      %p156 = scmp.eq.s32.totalorder %s28, 0
      %p157 = por %p155, %p156
      %p158 = scmp.le.s32.totalorder 1, %s22
      %p159 = scmp.lt.s32.totalorder %s22, 3
      %p160 = pnand %p158, %p159
      %p161 = pneg %p160
      // Predicated region
      $region9: #{tpu_custom_call.1} parent=5 // pred_check
        _
      $region10: #{tpu_custom_call.1} parent=5 // pred_check_branch
        %163 = sbr.rel (%p160) target = $region12
      $region11: #{tpu_custom_call.1} parent=5 // pred_region
        %s164 = ssub.s32 %s22, 1
      $region12: #{tpu_custom_call.1} parent=5 // pred_fallthru
        _
      %p165 = scmp.lt.s32.totalorder %s22, 2
      // Predicated region
      $region13: #{tpu_custom_call.1} parent=5 // pred_check
        %p166 = pneg %p165
      $region14: #{tpu_custom_call.1} parent=5 // pred_check_branch
        %168 = sbr.rel (%p166) target = $region16
      $region15: #{tpu_custom_call.1} parent=5 // pred_region
        // Predicated region
        $region17: #{tpu_custom_call.1} parent=15 // pred_check
          %p169 = pneg %p60
        $region18: #{tpu_custom_call.1} parent=15 // pred_check_branch
          %171 = sbr.rel (%p169) target = $region20
        $region19: #{tpu_custom_call.1} parent=15 // pred_region
          %s172 = sand.u32 %s50, 1
          %s173 = scalar_lea.sflag [#allocation5], %s172
          %s174 = sand.u32 %s50, 1
          %s175 = smul.addr %s174, 8
          %s176 = scalar_lea.vmem [#allocation4], %s175
          %s177 = sadd.s32 %s29, %s30
          %p178 = scmp.lt.s32.totalorder %s177, 1
          %s179 = scalar_select %p178, %s177, 1
          %s181 = ssub.s32 128, 128
          %182 = vsyncadd %s173, %s181
          %s183 = smul.addr %s179, 128
          %s184 = scalar_lea.hbm %s0, %s183
          %s186 = sshll.u32 %s176, 4
          %s187 = int_to_ptr.vmem [resolvable:$true] %s186
          %189 = dma.hbm_to_vmem [thread:$0]  %s184, 128, %s187, %s173
        $region20: #{tpu_custom_call.1} parent=15 // pred_fallthru
          _
        // Predicated region
        $region21: #{tpu_custom_call.1} parent=15 // pred_check
          %p190 = pneg %p92
        $region22: #{tpu_custom_call.1} parent=15 // pred_check_branch
          %192 = sbr.rel (%p190) target = $region24
        $region23: #{tpu_custom_call.1} parent=15 // pred_region
          %s193 = sand.u32 %s82, 1
          %s194 = scalar_lea.sflag [#allocation8], %s193
          %s195 = sand.u32 %s82, 1
          %s196 = smul.addr %s195, 8
          %s197 = scalar_lea.vmem [#allocation7], %s196
          %s198 = sadd.s32 %s29, %s30
          %p199 = scmp.lt.s32.totalorder %s198, 1
          %s200 = scalar_select %p199, %s198, 1
          %s202 = ssub.s32 128, 128
          %203 = vsyncadd %s194, %s202
          %s204 = smul.addr %s200, 128
          %s205 = scalar_lea.hbm %s1, %s204
          %s207 = sshll.u32 %s197, 4
          %s208 = int_to_ptr.vmem [resolvable:$true] %s207
          %210 = dma.hbm_to_vmem [thread:$0]  %s205, 128, %s208, %s194
        $region24: #{tpu_custom_call.1} parent=15 // pred_fallthru
          _
      $region16: #{tpu_custom_call.1} parent=5 // pred_fallthru
        _
      %p211 = scmp.le.s32.totalorder 1, %s22
      %p212 = scmp.lt.s32.totalorder %s22, 3
      %p213 = pnand %p211, %p212
      %p214 = pneg %p213
      // Predicated region
      $region25: #{tpu_custom_call.1} parent=5 // pred_check
        _
      $region26: #{tpu_custom_call.1} parent=5 // pred_check_branch
        %216 = sbr.rel (%p213) target = $region28
      $region27: #{tpu_custom_call.1} parent=5 // pred_region
        %s217 = ssub.s32 %s22, 1
        %s218 = sand.u32 %s53, 1
        %s219 = scalar_lea.sflag [#allocation5], %s218
        %s220 = sand.u32 %s53, 1
        %s221 = smul.addr %s220, 8
        %s222 = scalar_lea.vmem [#allocation4], %s221
        // Predicated region
        $region29: #{tpu_custom_call.1} parent=27 // pred_check
          %p223 = pneg %p66
        $region30: #{tpu_custom_call.1} parent=27 // pred_check_branch
          %225 = sbr.rel (%p223) target = $region32
        $region31: #{tpu_custom_call.1} parent=27 // pred_region
          %226 = dma.done %s219, 128
        $region32: #{tpu_custom_call.1} parent=27 // pred_fallthru
          _
        %s227 = sand.u32 %s85, 1
        %s228 = scalar_lea.sflag [#allocation8], %s227
        %s229 = sand.u32 %s85, 1
        %s230 = smul.addr %s229, 8
        %s231 = scalar_lea.vmem [#allocation7], %s230
        // Predicated region
        $region33: #{tpu_custom_call.1} parent=27 // pred_check
          %p232 = pneg %p98
        $region34: #{tpu_custom_call.1} parent=27 // pred_check_branch
          %234 = sbr.rel (%p232) target = $region36
        $region35: #{tpu_custom_call.1} parent=27 // pred_region
          %235 = dma.done %s228, 128
        $region36: #{tpu_custom_call.1} parent=27 // pred_fallthru
          _
        %s236 = sand.u32 %s53, 1
        %s237 = scalar_lea.sflag [#allocation5], %s236
        %s238 = sand.u32 %s53, 1
        %s239 = smul.addr %s238, 8
        %s240 = scalar_lea.vmem [#allocation4], %s239
        %p241 = pneg %p66
        %p242 = pneg %p63
        %s243 = sand.u32 %s85, 1
        %s244 = scalar_lea.sflag [#allocation8], %s243
        %s245 = sand.u32 %s85, 1
        %s246 = smul.addr %s245, 8
        %s247 = scalar_lea.vmem [#allocation7], %s246
        %p248 = pneg %p98
        %p249 = pneg %p95
        %p250 = pneg %p124
        %p251 = pneg %p121
        %s252 = sand.u32 %s111, 1
        %s253 = scalar_lea.sflag [#allocation6], %s252
        %s254 = sand.u32 %s111, 1
        %s255 = smul.addr %s254, 8
        %s256 = scalar_lea.vmem [#allocation9], %s255
        %p257 = pneg %p150
        %p258 = pneg %p147
        %s259 = sand.u32 %s137, 1
        %s260 = scalar_lea.sflag [#allocation11], %s259
        %s261 = sand.u32 %s137, 1
        %s262 = smul.addr %s261, 8
        %s263 = scalar_lea.vmem [#allocation10], %s262
        %s264 = sadd.s32 %s31, %s32
        %p265 = scmp.lt.s32.totalorder %s264, 1
        %s266 = scalar_select %p265, %s264, 1
        %s267 = sadd.s32 %s31, %s32
        %p268 = scmp.lt.s32.totalorder %s267, 1
        %s269 = scalar_select %p268, %s267, 1
        %p270 = scmp.eq.s32.totalorder %s32, 0
        // Predicated region
        $region37: #{tpu_custom_call.1} parent=27 // pred_check
          %p271 = pneg %p270
        $region38: #{tpu_custom_call.1} parent=27 // pred_check_branch
          %273 = sbr.rel (%p271) target = $region40
        $region39: #{tpu_custom_call.1} parent=27 // pred_region
          %274 = vst [vmem:[#allocation2] sm:$0xff] 0.0
          %275 = vst [vmem:[#allocation2 + $0x8] sm:$0xff] 0.0
          %276 = vst [vmem:[#allocation2 + $0x10] sm:$0xff] 0.0
          %277 = vst [vmem:[#allocation2 + $0x18] sm:$0xff] 0.0
          %278 = vst [vmem:[#allocation2 + $0x20] sm:$0xff] 0.0
          %279 = vst [vmem:[#allocation2 + $0x28] sm:$0xff] 0.0
          %280 = vst [vmem:[#allocation2 + $0x30] sm:$0xff] 0.0
          %281 = vst [vmem:[#allocation2 + $0x38] sm:$0xff] 0.0
          %282 = vst [vmem:[#allocation2 + $0x40] sm:$0xff] 0.0
          %283 = vst [vmem:[#allocation2 + $0x48] sm:$0xff] 0.0
          %284 = vst [vmem:[#allocation2 + $0x50] sm:$0xff] 0.0
          %285 = vst [vmem:[#allocation2 + $0x58] sm:$0xff] 0.0
          %286 = vst [vmem:[#allocation2 + $0x60] sm:$0xff] 0.0
          %287 = vst [vmem:[#allocation2 + $0x68] sm:$0xff] 0.0
          %288 = vst [vmem:[#allocation2 + $0x70] sm:$0xff] 0.0
          %289 = vst [vmem:[#allocation2 + $0x78] sm:$0xff] 0.0
          %290 = vst [vmem:[#allocation3] sm:$0xff] 0.0
          %291 = vst [vmem:[#allocation3 + $0x8] sm:$0xff] 0.0
          %292 = vst [vmem:[#allocation3 + $0x10] sm:$0xff] 0.0
          %293 = vst [vmem:[#allocation3 + $0x18] sm:$0xff] 0.0
          %294 = vst [vmem:[#allocation3 + $0x20] sm:$0xff] 0.0
          %295 = vst [vmem:[#allocation3 + $0x28] sm:$0xff] 0.0
          %296 = vst [vmem:[#allocation3 + $0x30] sm:$0xff] 0.0
          %297 = vst [vmem:[#allocation3 + $0x38] sm:$0xff] 0.0
          %298 = vst [vmem:[#allocation3 + $0x40] sm:$0xff] 0.0
          %299 = vst [vmem:[#allocation3 + $0x48] sm:$0xff] 0.0
          %300 = vst [vmem:[#allocation3 + $0x50] sm:$0xff] 0.0
          %301 = vst [vmem:[#allocation3 + $0x58] sm:$0xff] 0.0
          %302 = vst [vmem:[#allocation3 + $0x60] sm:$0xff] 0.0
          %303 = vst [vmem:[#allocation3 + $0x68] sm:$0xff] 0.0
          %304 = vst [vmem:[#allocation3 + $0x70] sm:$0xff] 0.0
          %305 = vst [vmem:[#allocation3 + $0x78] sm:$0xff] 0.0
        $region40: #{tpu_custom_call.1} parent=27 // pred_fallthru
          _
        %v306 = vld [vmem:[%s222] sm:$0xff]
        %v307 = vld [vmem:[%s231] sm:$0xff]
        %v308 = vsub.f32 %v306, %v307
        %v309 = vld [vmem:[#allocation2] sm:$0xff]
        %v310 = vand.u32 2147483647, %v308
        %v311 = vadd.f32 %v309, %v310
        %312 = vst [vmem:[#allocation2] sm:$0xff] %v311
        %v313 = vld [vmem:[#allocation3] sm:$0xff]
        %v314 = vmul.f32 %v308, %v308
        %v315 = vadd.f32 %v313, %v314
        %316 = vst [vmem:[#allocation3] sm:$0xff] %v315
        // Predicated region
        $region41: #{tpu_custom_call.1} parent=27 // pred_check
          %p317 = pneg %p270
        $region42: #{tpu_custom_call.1} parent=27 // pred_check_branch
          %319 = sbr.rel (%p317) target = $region44
        $region43: #{tpu_custom_call.1} parent=27 // pred_region
          %v320 = vld [vmem:[#allocation2] sm:$0xff]
          %v321 = vld [vmem:[#allocation2 + $0x8] sm:$0xff]
          %v322 = vld [vmem:[#allocation2 + $0x10] sm:$0xff]
          %v323 = vld [vmem:[#allocation2 + $0x18] sm:$0xff]
          %v324 = vld [vmem:[#allocation2 + $0x20] sm:$0xff]
          %v325 = vld [vmem:[#allocation2 + $0x28] sm:$0xff]
          %v326 = vld [vmem:[#allocation2 + $0x30] sm:$0xff]
          %v327 = vld [vmem:[#allocation2 + $0x38] sm:$0xff]
          %v328 = vld [vmem:[#allocation2 + $0x40] sm:$0xff]
          %v329 = vld [vmem:[#allocation2 + $0x48] sm:$0xff]
          %v330 = vld [vmem:[#allocation2 + $0x50] sm:$0xff]
          %v331 = vld [vmem:[#allocation2 + $0x58] sm:$0xff]
          %v332 = vld [vmem:[#allocation2 + $0x60] sm:$0xff]
          %v333 = vld [vmem:[#allocation2 + $0x68] sm:$0xff]
          %v334 = vld [vmem:[#allocation2 + $0x70] sm:$0xff]
          %v335 = vld [vmem:[#allocation2 + $0x78] sm:$0xff]
          %v336 = vadd.f32 %v320, %v321
          %v337 = vadd.f32 %v336, %v322
          %v338 = vadd.f32 %v337, %v323
          %v339 = vadd.f32 %v338, %v324
          %v340 = vadd.f32 %v339, %v325
          %v341 = vadd.f32 %v340, %v326
          %v342 = vadd.f32 %v341, %v327
          %v343 = vadd.f32 %v342, %v328
          %v344 = vadd.f32 %v343, %v329
          %v345 = vadd.f32 %v344, %v330
          %v346 = vadd.f32 %v345, %v331
          %v347 = vadd.f32 %v346, %v332
          %v348 = vadd.f32 %v347, %v333
          %v349 = vadd.f32 %v348, %v334
          %v350 = vadd.f32 %v349, %v335
          %351 = vst [vmem:[%s256] sm:$0xff] %v350
          %v352 = vld [vmem:[#allocation3] sm:$0xff]
          %v353 = vld [vmem:[#allocation3 + $0x8] sm:$0xff]
          %v354 = vld [vmem:[#allocation3 + $0x10] sm:$0xff]
          %v355 = vld [vmem:[#allocation3 + $0x18] sm:$0xff]
          %v356 = vld [vmem:[#allocation3 + $0x20] sm:$0xff]
          %v357 = vld [vmem:[#allocation3 + $0x28] sm:$0xff]
          %v358 = vld [vmem:[#allocation3 + $0x30] sm:$0xff]
          %v359 = vld [vmem:[#allocation3 + $0x38] sm:$0xff]
          %v360 = vld [vmem:[#allocation3 + $0x40] sm:$0xff]
          %v361 = vld [vmem:[#allocation3 + $0x48] sm:$0xff]
          %v362 = vld [vmem:[#allocation3 + $0x50] sm:$0xff]
          %v363 = vld [vmem:[#allocation3 + $0x58] sm:$0xff]
          %v364 = vld [vmem:[#allocation3 + $0x60] sm:$0xff]
          %v365 = vld [vmem:[#allocation3 + $0x68] sm:$0xff]
          %v366 = vld [vmem:[#allocation3 + $0x70] sm:$0xff]
          %v367 = vld [vmem:[#allocation3 + $0x78] sm:$0xff]
          %v368 = vadd.f32 %v352, %v353
          %v369 = vadd.f32 %v368, %v354
          %v370 = vadd.f32 %v369, %v355
          %v371 = vadd.f32 %v370, %v356
          %v372 = vadd.f32 %v371, %v357
          %v373 = vadd.f32 %v372, %v358
          %v374 = vadd.f32 %v373, %v359
          %v375 = vadd.f32 %v374, %v360
          %v376 = vadd.f32 %v375, %v361
          %v377 = vadd.f32 %v376, %v362
          %v378 = vadd.f32 %v377, %v363
          %v379 = vadd.f32 %v378, %v364
          %v380 = vadd.f32 %v379, %v365
          %v381 = vadd.f32 %v380, %v366
          %v382 = vadd.f32 %v381, %v367
          %383 = vst [vmem:[%s263] sm:$0xff] %v382
        $region44: #{tpu_custom_call.1} parent=27 // pred_fallthru
          _
        %s384 = sand.u32 %s111, 1
        %s385 = scalar_lea.sflag [#allocation6], %s384
        %s386 = sand.u32 %s111, 1
        %s387 = smul.addr %s386, 8
        %s388 = scalar_lea.vmem [#allocation9], %s387
        %s389 = sand.u32 %s137, 1
        %s390 = scalar_lea.sflag [#allocation11], %s389
        %s391 = sand.u32 %s137, 1
        %s392 = smul.addr %s391, 8
        %s393 = scalar_lea.vmem [#allocation10], %s392
        // Predicated region
        $region45: #{tpu_custom_call.1} parent=27 // pred_check
          %p394 = pneg %p121
        $region46: #{tpu_custom_call.1} parent=27 // pred_check_branch
          %396 = sbr.rel (%p394) target = $region48
        $region47: #{tpu_custom_call.1} parent=27 // pred_region
          %s398 = ssub.s32 128, 128
          %399 = vsyncadd %s385, %s398
          %s400 = smul.addr %s31, 128
          %s401 = scalar_lea.hbm %s2, %s400
          %s403 = sshll.u32 %s388, 4
          %s404 = int_to_ptr.vmem [resolvable:$true] %s403
          %406 = dma.vmem_to_hbm [thread:$0]  %s404, 128, %s401, %s385
        $region48: #{tpu_custom_call.1} parent=27 // pred_fallthru
          _
        // Predicated region
        $region49: #{tpu_custom_call.1} parent=27 // pred_check
          %p407 = pneg %p147
        $region50: #{tpu_custom_call.1} parent=27 // pred_check_branch
          %409 = sbr.rel (%p407) target = $region52
        $region51: #{tpu_custom_call.1} parent=27 // pred_region
          %s411 = ssub.s32 128, 128
          %412 = vsyncadd %s390, %s411
          %s413 = smul.addr %s31, 128
          %s414 = scalar_lea.hbm %s3, %s413
          %s416 = sshll.u32 %s393, 4
          %s417 = int_to_ptr.vmem [resolvable:$true] %s416
          %419 = dma.vmem_to_hbm [thread:$0]  %s417, 128, %s414, %s390
        $region52: #{tpu_custom_call.1} parent=27 // pred_fallthru
          _
      $region28: #{tpu_custom_call.1} parent=5 // pred_fallthru
        _
      %p420 = scmp.le.s32.totalorder 2, %s22
      // Predicated region
      $region53: #{tpu_custom_call.1} parent=5 // pred_check
        %p421 = pneg %p420
      $region54: #{tpu_custom_call.1} parent=5 // pred_check_branch
        %423 = sbr.rel (%p421) target = $region56
      $region55: #{tpu_custom_call.1} parent=5 // pred_region
        %s424 = ssub.s32 %s22, 2
        // Predicated region
        $region57: #{tpu_custom_call.1} parent=55 // pred_check
          %p425 = pneg %p127
        $region58: #{tpu_custom_call.1} parent=55 // pred_check_branch
          %427 = sbr.rel (%p425) target = $region60
        $region59: #{tpu_custom_call.1} parent=55 // pred_region
          %s428 = sand.u32 %s112, 1
          %s429 = scalar_lea.sflag [#allocation6], %s428
          %s430 = sand.u32 %s112, 1
          %s431 = smul.addr %s430, 8
          %s432 = scalar_lea.vmem [#allocation9], %s431
          %433 = dma.done %s429, 128
        $region60: #{tpu_custom_call.1} parent=55 // pred_fallthru
          _
        // Predicated region
        $region61: #{tpu_custom_call.1} parent=55 // pred_check
          %p434 = pneg %p153
        $region62: #{tpu_custom_call.1} parent=55 // pred_check_branch
          %436 = sbr.rel (%p434) target = $region64
        $region63: #{tpu_custom_call.1} parent=55 // pred_region
          %s437 = sand.u32 %s138, 1
          %s438 = scalar_lea.sflag [#allocation11], %s437
          %s439 = sand.u32 %s138, 1
          %s440 = smul.addr %s439, 8
          %s441 = scalar_lea.vmem [#allocation10], %s440
          %442 = dma.done %s438, 128
        $region64: #{tpu_custom_call.1} parent=55 // pred_fallthru
          _
      $region56: #{tpu_custom_call.1} parent=5 // pred_fallthru
        _
    $region6: #{tpu_custom_call.1} parent=1 // loop_footer
      %s26 = sadd.s32 1, %s22
    $region7: #{tpu_custom_call.1} parent=1 // loop_footer_branch
      %21 = sbr.rel target = $region3
    $region8: #{tpu_custom_call.1} parent=1 // loop_exit
      _
    %443 = vsyncpa [#allocation5], 1
    %s444 = scalar_lea.sflag [#allocation5], 1
    %445 = vsyncpa %s444, 1
    %446 = vsyncpa [#allocation8], 1
    %s447 = scalar_lea.sflag [#allocation8], 1
    %448 = vsyncpa %s447, 1
    %449 = vsyncpa [#allocation6], 1
    %s450 = scalar_lea.sflag [#allocation6], 1
    %451 = vsyncpa %s450, 1
    %452 = vsyncpa [#allocation11], 1
    %s453 = scalar_lea.sflag [#allocation11], 1
    %454 = vsyncpa %s453, 1

</llo_original>
